<compile_context>
chip_gen: v6e
topology: v6e:2x2x1
jax: 0.10.0
libtpu: 0.0.40
codegen_flags: <defaults>
</compile_context>

<pallas_src>
import jax
import jax.numpy as jnp
from jax.experimental import pallas as pl
from jax.experimental.pallas import tpu as pltpu

# Mirrors the global FC_LAYERS config used by dqn.py (TPU-friendly hidden=128).
FC_LAYERS = [[128], [128]]

_LANE = 128
_SUBLANE = 8


def _round_up(x, m):
    return ((x + m - 1) // m) * m


def init_dqn_params(key, input_size, n_actions, dtype=jnp.float32):
    """PyTorch nn.Linear default init: U(-1/sqrt(fan_in), +1/sqrt(fan_in)).

    Weights are stored transposed as (in_features, out_features) so the kernel
    computes x @ W + b (numerically identical to PyTorch's x @ W.T + b).
    """
    sizes = []
    prev = input_size
    for layer in FC_LAYERS:
        out = layer[0] if len(layer) == 1 else layer[1]
        sizes.append((prev, out))
        prev = out
    sizes.append((prev, n_actions))  # output linear replaces the last ReLU

    params = []
    for fan_in, fan_out in sizes:
        key, kw, kb = jax.random.split(key, 3)
        bound = 1.0 / (fan_in ** 0.5)
        w = jax.random.uniform(kw, (fan_in, fan_out), dtype, -bound, bound)
        b = jax.random.uniform(kb, (fan_out,), dtype, -bound, bound)
        params.append((w, b))
    return params


def prepare_packed_params(params):
    """Fuse the trailing (no-ReLU) linear pair and pack everything into one
    lane-dense (R, LW) f32 buffer with 8-row-aligned component offsets.

    Returns (packed, meta) where meta = (kp, lw, layer_meta, n_actions) and
    layer_meta is a tuple of (w_row_offset, w_rows, b_row_offset, relu_after).
    Done once, offline, outside the per-step forward.
    """
    num = len(params)
    input_size = params[0][0].shape[0]
    n_actions = params[-1][0].shape[1]

    # Original semantics: ReLU after every hidden linear except the last one
    # (its ReLU was overwritten by the output linear in __init__), so the last
    # two linears compose into a single affine map:
    #   (h @ W2 + b2) @ Wo + bo == h @ (W2 @ Wo) + (b2 @ Wo + bo)
    (w2, b2), (wo, bo) = params[-2], params[-1]
    wf = jnp.dot(w2, wo, preferred_element_type=jnp.float32)
    bf = jnp.dot(b2, wo, preferred_element_type=jnp.float32) + bo
    eff = [(w.astype(jnp.float32), b.astype(jnp.float32)) for w, b in params[:-2]]
    eff.append((wf.astype(jnp.float32), bf.astype(jnp.float32)))
    eff_relu = [True] * (num - 2) + [False]

    max_out = max(w.shape[1] for w, _ in eff)
    lw = _round_up(max_out, _LANE)           # lane width of the packed buffer
    kp = _round_up(input_size, _SUBLANE)     # padded contraction dim for layer 1

    blocks = []
    layer_meta = []
    row = 0
    in_rows = kp
    for (w, b), relu in zip(eff, eff_relu):
        fan_in, fan_out = w.shape
        wblk = jnp.zeros((in_rows, lw), jnp.float32).at[:fan_in, :fan_out].set(w)
        bblk = jnp.zeros((_SUBLANE, lw), jnp.float32).at[0, :fan_out].set(b)
        blocks += [wblk, bblk]
        layer_meta.append((row, in_rows, row + in_rows, relu))
        row += in_rows + _SUBLANE
        in_rows = lw                          # subsequent layers consume LW-wide h

    packed = jnp.concatenate(blocks, axis=0)  # (208, 128) for the demo config
    meta = (kp, lw, tuple(layer_meta), n_actions)
    return packed, meta


def make_packed_mlp_kernel(layer_meta):
    """Kernel: one (TM, Kp) activation tile in x_ref, all params resident in p_ref."""

    def kernel(x_ref, p_ref, o_ref):
        h = x_ref[...]
        for w_off, w_rows, b_off, relu in layer_meta:     # static Python loop
            w = p_ref[w_off:w_off + w_rows, :]            # 8-aligned static slices
            b = p_ref[b_off:b_off + 1, :]
            h = jnp.dot(h, w, preferred_element_type=jnp.float32) + b
            if relu:
                h = jnp.maximum(h, 0.0)
        o_ref[...] = h.astype(o_ref.dtype)

    return kernel


def _tile_batch(batch, max_tm):
    """Pick (tm, b_pad): 8-aligned tile height with minimal zero-padding."""
    b8 = _round_up(max(batch, 1), _SUBLANE)
    n_tiles = -(-b8 // max_tm)                     # ceil-div
    tm = _round_up(-(-b8 // n_tiles), _SUBLANE)    # balanced tile height
    return tm, n_tiles * tm


def dqn_forward(state, packed, meta, *, max_tm=256):
    """Q(state) for a (batch, input_size) batch of states."""
    kp, lw, layer_meta, n_actions = meta
    batch, in_feat = state.shape

    # Balanced batch tiles: up to 256 rows (full MXU height on v6e/v7x),
    # sized so total padding is minimal (e.g. 300 -> 2 x 152, not 2 x 256).
    tm, b_pad = _tile_batch(batch, max_tm)

    x = state.astype(jnp.float32)
    if (b_pad, kp) != (batch, in_feat):
        x = jnp.pad(x, ((0, b_pad - batch), (0, kp - in_feat)))

    grid = (b_pad // tm,)
    flops = 2 * b_pad * sum(w_rows * lw for (_, w_rows, _, _) in layer_meta)
    bytes_accessed = 4 * (b_pad * kp + int(packed.size) + b_pad * lw)

    out = pl.pallas_call(
        make_packed_mlp_kernel(layer_meta),
        out_shape=jax.ShapeDtypeStruct((b_pad, lw), jnp.float32),
        grid=grid,
        in_specs=[
            pl.BlockSpec((tm, kp), lambda i: (i, 0)),        # streamed activations
            pl.BlockSpec(packed.shape, lambda i: (0, 0)),    # resident parameters
        ],
        out_specs=pl.BlockSpec((tm, lw), lambda i: (i, 0)),  # lane-dense output
        compiler_params=pltpu.CompilerParams(
            dimension_semantics=("parallel",)),              # dual-TC sharding on v7x
        cost_estimate=pl.CostEstimate(
            flops=flops, transcendentals=0, bytes_accessed=bytes_accessed),
    )(x, packed)

    return out[:batch, :n_actions].astype(state.dtype)


def dqn_forward_ref(state, params):
    """Plain-JAX reference with the original (unfused) layer structure."""
    num = len(params)
    h = state
    for li, (w, b) in enumerate(params):
        h = h @ w + b
        if li < num - 2:  # ReLU only after hidden linears 1..L-1 (last was replaced)
            h = jnp.maximum(h, 0.0)
    return h


if __name__ == "__main__":
    key = jax.random.PRNGKey(0)
    key, k_state = jax.random.split(key)

    batch = 8
    input_size = 64     # flattened 6D-snake state features
    n_actions = 12      # +/- move along each of the 6 dimensions

    state = jax.random.normal(k_state, (batch, input_size), dtype=jnp.float32)
    params = init_dqn_params(key, input_size, n_actions)
    packed, meta = prepare_packed_params(params)

    out = dqn_forward(state, packed, meta)
    out = jax.block_until_ready(out)
    ref = dqn_forward_ref(state, params)
    assert out.shape == (batch, n_actions)
    assert jnp.allclose(out, ref, atol=1e-4, rtol=1e-4), "Pallas output mismatch vs reference"

    # Replay-style larger batch: exercises the batch grid, balanced tiling,
    # resident weights and padding (300 -> 2 tiles of 152 rows).
    key, k_big = jax.random.split(key)
    big = jax.random.normal(k_big, (300, input_size), dtype=jnp.float32)
    out_big = jax.block_until_ready(dqn_forward(big, packed, meta))
    ref_big = dqn_forward_ref(big, params)
    assert out_big.shape == (300, n_actions)
    assert jnp.allclose(out_big, ref_big, atol=1e-4, rtol=1e-4), "Pallas output mismatch (batched)"

    print("KERNEL_OK")
</pallas_src>

<mosaic_0001>
module attributes {stable_mosaic.version = 11 : i64} {
  func.func @kernel(%arg0: i32, %arg1: memref<8x64xf32, #tpu.memory_space<vmem>>, %arg2: memref<208x128xf32, #tpu.memory_space<vmem>>, %arg3: memref<8x128xf32, #tpu.memory_space<vmem>>) attributes {dimension_semantics = [#tpu.dimension_semantics<parallel>], iteration_bounds = array<i64: 1>, scalar_prefetch = 0 : i64, scratch_operands = 0 : i64, tpu.core_type = #tpu.core_type<tc>, window_params = [{transform_indices = @transform_0, window_bounds = array<i64: 8, 64>}, {pipeline_mode = #tpu.pipeline_mode<synchronous>, transform_indices = @transform_1, window_bounds = array<i64: 208, 128>}, {transform_indices = @transform_2, window_bounds = array<i64: 8, 128>}]} {
    %c0 = arith.constant 0 : index
    %c0_0 = arith.constant 0 : index
    %0 = vector.load %arg1[%c0, %c0_0] : memref<8x64xf32, #tpu.memory_space<vmem>>, vector<8x64xf32>
    %c0_1 = arith.constant 0 : index
    %c0_2 = arith.constant 0 : index
    %1 = vector.load %arg2[%c0_1, %c0_2] : memref<208x128xf32, #tpu.memory_space<vmem>>, vector<64x128xf32>
    %c64 = arith.constant 64 : index
    %c0_3 = arith.constant 0 : index
    %2 = vector.load %arg2[%c64, %c0_3] : memref<208x128xf32, #tpu.memory_space<vmem>>, vector<1x128xf32>
    %cst = arith.constant dense<0.000000e+00> : vector<8x128xf32>
    %3 = tpu.matmul %0, %1, %cst {dimension_numbers = #tpu.dot_dimension_numbers<[1], [0], [0], [1], [0, 0, 1, 1], [], []>} : vector<8x64xf32>, vector<64x128xf32>, vector<8x128xf32> -> vector<8x128xf32>
    %4 = vector.broadcast %2 : vector<1x128xf32> to vector<8x128xf32>
    %5 = arith.addf %3, %4 : vector<8x128xf32>
    %cst_4 = arith.constant 0.000000e+00 : f32
    %6 = vector.broadcast %cst_4 : f32 to vector<8x128xf32>
    %7 = arith.maximumf %5, %6 : vector<8x128xf32>
    %c72 = arith.constant 72 : index
    %c0_5 = arith.constant 0 : index
    %8 = vector.load %arg2[%c72, %c0_5] : memref<208x128xf32, #tpu.memory_space<vmem>>, vector<128x128xf32>
    %c200 = arith.constant 200 : index
    %c0_6 = arith.constant 0 : index
    %9 = vector.load %arg2[%c200, %c0_6] : memref<208x128xf32, #tpu.memory_space<vmem>>, vector<1x128xf32>
    %cst_7 = arith.constant dense<0.000000e+00> : vector<8x128xf32>
    %10 = tpu.matmul %7, %8, %cst_7 {dimension_numbers = #tpu.dot_dimension_numbers<[1], [0], [0], [1], [0, 0, 1, 1], [], []>} : vector<8x128xf32>, vector<128x128xf32>, vector<8x128xf32> -> vector<8x128xf32>
    %11 = vector.broadcast %9 : vector<1x128xf32> to vector<8x128xf32>
    %12 = arith.addf %10, %11 : vector<8x128xf32>
    %c0_8 = arith.constant 0 : index
    %c0_9 = arith.constant 0 : index
    %13 = vector.load %arg3[%c0_8, %c0_9] : memref<8x128xf32, #tpu.memory_space<vmem>>, vector<8x128xf32>
    tpu.vector_store %arg3[%c0_8, %c0_9], %12 {strides = array<i32>} : memref<8x128xf32, #tpu.memory_space<vmem>>, vector<8x128xf32>,
    return
  }
  func.func @transform_0(%arg0: i32) -> (i32, i32) {
    %c0_i32 = arith.constant 0 : i32
    %c0_i32_0 = arith.constant 0 : i32
    return %arg0, %c0_i32 : i32, i32
  }
  func.func @transform_1(%arg0: i32) -> (i32, i32) {
    %c0_i32 = arith.constant 0 : i32
    %c0_i32_0 = arith.constant 0 : i32
    %c0_i32_1 = arith.constant 0 : i32
    return %c0_i32, %c0_i32_0 : i32, i32
  }
  func.func @transform_2(%arg0: i32) -> (i32, i32) {
    %c0_i32 = arith.constant 0 : i32
    %c0_i32_0 = arith.constant 0 : i32
    return %arg0, %c0_i32 : i32, i32
  }
}

</mosaic_0001>

<llo_original>
// kernel: tpu_custom_call.1
$region0: #{tpu_custom_call.1}
  #allocation0 [shape = 'u32[]', space=smem, size = 0x4, offset = 0x4, fixed_abs, tag = 'smem constant byte address 0x4 - core index']
  #allocation1 [shape = 'u32[144,128]{1,0:T(1,128)}', space=vmem, size = 0x12000, scoped, tag = 'internal scratch']
  %s0 = inlined_call_operand.hbm [shape: f32[8,64], index: 0, kind: input, shape index: {}]
  %s1 = inlined_call_operand.hbm [shape: f32[208,128], index: 1, kind: input, shape index: {}]
  %s2 = inlined_call_operand.hbm [shape: f32[8,128], index: 2, kind: output, shape index: {}]
  %s3 = sld [smem:[#allocation0]]
  $region26: #{tpu_custom_call.1} parent=0
    _
  %s5 = ssub.s32 1, %s3
  %s6 = scalar_select 0, %s5, %s3
  $region1: #{tpu_custom_call.1} parent=0
    #allocation2 [shape = 'u8[4096]{0}', space=vmem, size = 0x1000, scoped, tag = 'input window, operand 0, single buffered']
    #allocation3 [shape = 's32[1]{0}', space=sflag, size = 0x4, scoped, tag = 'scoped memory for tpu_custom_call.1']
    #allocation4 [shape = 's32[1]{0}', space=sflag, size = 0x4, scoped, tag = 'scoped memory for tpu_custom_call.1']
    #allocation5 [shape = 'u8[106496]{0}', space=vmem, size = 0x1a000, scoped, tag = 'input window, operand 1, single buffered']
    #allocation6 [shape = 's32[1]{0}', space=sflag, size = 0x4, scoped, tag = 'scoped memory for tpu_custom_call.1']
    #allocation7 [shape = 'u8[4096]{0}', space=vmem, size = 0x1000, scoped, tag = 'output window, operand 0, single buffered']
    %7 = vsyncpa [#allocation3], 0
    %8 = vsyncpa [#allocation6], 0
    %9 = vsyncpa [#allocation4], 0
    // Predicated region
    $region2: #{tpu_custom_call.1} parent=1 // pred_check
      _
    $region3: #{tpu_custom_call.1} parent=1 // pred_check_branch
      %11 = sbr.rel (0) target = $region5
    $region4: #{tpu_custom_call.1} parent=1 // pred_region
      %s13 = ssub.s32 128, 128
      %14 = vsyncadd [#allocation3], %s13
      %s16 = sshll.u32 [#allocation2], 4
      %s17 = int_to_ptr.vmem [resolvable:$true] %s16
      %19 = dma.hbm_to_vmem [thread:$0]  %s0, 128, %s17, [#allocation3]
    $region5: #{tpu_custom_call.1} parent=1 // pred_fallthru
      _
    // Predicated region
    $region6: #{tpu_custom_call.1} parent=1 // pred_check
      _
    $region7: #{tpu_custom_call.1} parent=1 // pred_check_branch
      %21 = sbr.rel (0) target = $region9
    $region8: #{tpu_custom_call.1} parent=1 // pred_region
      %s23 = ssub.s32 3328, 3328
      %24 = vsyncadd [#allocation6], %s23
      %s25 = sshll.u32 [#allocation5], 4
      %s26 = int_to_ptr.vmem [resolvable:$true] %s25
      %31 = dma.hbm_to_vmem [thread:$0]  %s1, 3328, %s26, [#allocation6], 128, 128, 8
    $region9: #{tpu_custom_call.1} parent=1 // pred_fallthru
      _
    // Predicated region
    $region10: #{tpu_custom_call.1} parent=1 // pred_check
      _
    $region11: #{tpu_custom_call.1} parent=1 // pred_check_branch
      %33 = sbr.rel (0) target = $region13
    $region12: #{tpu_custom_call.1} parent=1 // pred_region
      %34 = dma.done [#allocation3], 128
    $region13: #{tpu_custom_call.1} parent=1 // pred_fallthru
      _
    // Predicated region
    $region14: #{tpu_custom_call.1} parent=1 // pred_check
      _
    $region15: #{tpu_custom_call.1} parent=1 // pred_check_branch
      %36 = sbr.rel (0) target = $region17
    $region16: #{tpu_custom_call.1} parent=1 // pred_region
      %37 = dma.done [#allocation6], 3328
    $region17: #{tpu_custom_call.1} parent=1 // pred_fallthru
      _
    %v38 = vld [vmem:[#allocation2] sm:$0xff]
    %v39 = vld [vmem:[#allocation5] sm:$0xff]
    %v40 = vld [vmem:[#allocation5 + $0x8] sm:$0xff]
    %v41 = vld [vmem:[#allocation5 + $0x10] sm:$0xff]
    %v42 = vld [vmem:[#allocation5 + $0x18] sm:$0xff]
    %v43 = vld [vmem:[#allocation5 + $0x20] sm:$0xff]
    %v44 = vld [vmem:[#allocation5 + $0x28] sm:$0xff]
    %v45 = vld [vmem:[#allocation5 + $0x30] sm:$0xff]
    %v46 = vld [vmem:[#allocation5 + $0x38] sm:$0xff]
    %v47 = vld [vmem:[#allocation5 + $0x40] sm:$0x1]
    %v48 = vlaneseq
    %v49 = vshrl.u32 %v48, 7
    %v50 = vsub.s32 0, %v49
    %v51 = vrot.slane %v47, %v50
    %vm52 = vcmask 523264
    %v54 = vsel %vm52, %v38, 0
    %56 = vmatprep.subr.mxu0 0.0
    %57 = vmatpush1.msra.mxu0 0.0
    %58 = vmatprep.subr.mxu0 0.0
    %59 = vmatpush1.msra.mxu0 0.0
    %60 = vmatprep.subr.mxu0 0.0
    %61 = vmatpush1.msra.mxu0 0.0
    %62 = vmatprep.subr.mxu0 0.0
    %63 = vmatpush1.msra.mxu0 0.0
    %64 = vmatprep.subr.mxu0 0.0
    %65 = vmatpush1.msra.mxu0 0.0
    %66 = vmatprep.subr.mxu0 0.0
    %67 = vmatpush1.msra.mxu0 0.0
    %68 = vmatprep.subr.mxu0 0.0
    %69 = vmatpush1.msra.mxu0 0.0
    %70 = vmatprep.subr.mxu0 0.0
    %71 = vmatpush1.msra.mxu0 0.0
    %72 = vmatprep.subr.mxu0 0.0
    %73 = vmatpush1.msra.mxu0 %v46
    %74 = vmatprep.subr.mxu0 0.0
    %75 = vmatpush1.msra.mxu0 %v45
    %76 = vmatprep.subr.mxu0 0.0
    %77 = vmatpush1.msra.mxu0 %v44
    %78 = vmatprep.subr.mxu0 0.0
    %79 = vmatpush1.msra.mxu0 %v43
    %80 = vmatprep.subr.mxu0 0.0
    %81 = vmatpush1.msra.mxu0 %v42
    %82 = vmatprep.subr.mxu0 0.0
    %83 = vmatpush1.msra.mxu0 %v41
    %84 = vmatprep.subr.mxu0 0.0
    %85 = vmatpush1.msra.mxu0 %v40
    %86 = vmatprep.subr.mxu0 0.0
    %87 = vmatpush1.msra.mxu0 %v39
    %88 = vmatprep.subr.mxu0 0.0
    %89 = vmatpush2.msra.mxu0 0.0
    %90 = vmatprep.subr.mxu0 0.0
    %91 = vmatpush2.msra.mxu0 0.0
    %92 = vmatprep.subr.mxu0 0.0
    %93 = vmatpush2.msra.mxu0 0.0
    %94 = vmatprep.subr.mxu0 0.0
    %95 = vmatpush2.msra.mxu0 0.0
    %96 = vmatprep.subr.mxu0 0.0
    %97 = vmatpush2.msra.mxu0 0.0
    %98 = vmatprep.subr.mxu0 0.0
    %99 = vmatpush2.msra.mxu0 0.0
    %100 = vmatprep.subr.mxu0 0.0
    %101 = vmatpush2.msra.mxu0 0.0
    %102 = vmatprep.subr.mxu0 0.0
    %103 = vmatpush2.msra.mxu0 0.0
    %104 = vmatprep.subr.mxu0 0.0
    %105 = vmatpush2.msra.mxu0 0.0
    %106 = vmatprep.subr.mxu0 0.0
    %107 = vmatpush2.msra.mxu0 0.0
    %108 = vmatprep.subr.mxu0 0.0
    %109 = vmatpush2.msra.mxu0 0.0
    %110 = vmatprep.subr.mxu0 0.0
    %111 = vmatpush2.msra.mxu0 0.0
    %112 = vmatprep.subr.mxu0 0.0
    %113 = vmatpush2.msra.mxu0 0.0
    %114 = vmatprep.subr.mxu0 0.0
    %115 = vmatpush2.msra.mxu0 0.0
    %116 = vmatprep.subr.mxu0 0.0
    %117 = vmatpush2.msra.mxu0 0.0
    %118 = vmatprep.subr.mxu0 0.0
    %119 = vmatpush2.msra.mxu0 0.0
    %120 = vmatprep.mubr.f32.mxu0 0.0
    %121 = vmatmul.mubr.f32.gmra.mxu0 %v54
    %v122 = vpop.f32.mrf.mxu0
    %v123 = vadd.f32 %v51, %v122
    %v124 = vpop.f32.mrf.mxu0
    %125 = vdwg.mxu0
    %v126 = vmax.f32 %v123, 0.0
    %v127 = vld [vmem:[#allocation5 + $0x48] sm:$0xff]
    %v128 = vld [vmem:[#allocation5 + $0x50] sm:$0xff]
    %v129 = vld [vmem:[#allocation5 + $0x58] sm:$0xff]
    %v130 = vld [vmem:[#allocation5 + $0x60] sm:$0xff]
    %v131 = vld [vmem:[#allocation5 + $0x68] sm:$0xff]
    %v132 = vld [vmem:[#allocation5 + $0x70] sm:$0xff]
    %v133 = vld [vmem:[#allocation5 + $0x78] sm:$0xff]
    %v134 = vld [vmem:[#allocation5 + $0x80] sm:$0xff]
    %v135 = vld [vmem:[#allocation5 + $0x88] sm:$0xff]
    %v136 = vld [vmem:[#allocation5 + $0x90] sm:$0xff]
    %v137 = vld [vmem:[#allocation5 + $0x98] sm:$0xff]
    %v138 = vld [vmem:[#allocation5 + $0xa0] sm:$0xff]
    %v139 = vld [vmem:[#allocation5 + $0xa8] sm:$0xff]
    %v140 = vld [vmem:[#allocation5 + $0xb0] sm:$0xff]
    %v141 = vld [vmem:[#allocation5 + $0xb8] sm:$0xff]
    %v142 = vld [vmem:[#allocation5 + $0xc0] sm:$0xff]
    %v143 = vld [vmem:[#allocation5 + $0xc8] sm:$0x1]
    %v144 = vlaneseq
    %v145 = vshrl.u32 %v144, 7
    %v146 = vsub.s32 0, %v145
    %v147 = vrot.slane %v143, %v146
    %148 = vmatprep.subr.mxu0 0.0
    %149 = vmatpush1.msra.mxu0 %v142
    %150 = vmatprep.subr.mxu0 0.0
    %151 = vmatpush1.msra.mxu0 %v141
    %152 = vmatprep.subr.mxu0 0.0
    %153 = vmatpush1.msra.mxu0 %v140
    %154 = vmatprep.subr.mxu0 0.0
    %155 = vmatpush1.msra.mxu0 %v139
    %156 = vmatprep.subr.mxu0 0.0
    %157 = vmatpush1.msra.mxu0 %v138
    %158 = vmatprep.subr.mxu0 0.0
    %159 = vmatpush1.msra.mxu0 %v137
    %160 = vmatprep.subr.mxu0 0.0
    %161 = vmatpush1.msra.mxu0 %v136
    %162 = vmatprep.subr.mxu0 0.0
    %163 = vmatpush1.msra.mxu0 %v135
    %164 = vmatprep.subr.mxu0 0.0
    %165 = vmatpush1.msra.mxu0 %v134
    %166 = vmatprep.subr.mxu0 0.0
    %167 = vmatpush1.msra.mxu0 %v133
    %168 = vmatprep.subr.mxu0 0.0
    %169 = vmatpush1.msra.mxu0 %v132
    %170 = vmatprep.subr.mxu0 0.0
    %171 = vmatpush1.msra.mxu0 %v131
    %172 = vmatprep.subr.mxu0 0.0
    %173 = vmatpush1.msra.mxu0 %v130
    %174 = vmatprep.subr.mxu0 0.0
    %175 = vmatpush1.msra.mxu0 %v129
    %176 = vmatprep.subr.mxu0 0.0
    %177 = vmatpush1.msra.mxu0 %v128
    %178 = vmatprep.subr.mxu0 0.0
    %179 = vmatpush1.msra.mxu0 %v127
    %180 = vmatprep.subr.mxu0 0.0
    %181 = vmatpush2.msra.mxu0 0.0
    %182 = vmatprep.subr.mxu0 0.0
    %183 = vmatpush2.msra.mxu0 0.0
    %184 = vmatprep.subr.mxu0 0.0
    %185 = vmatpush2.msra.mxu0 0.0
    %186 = vmatprep.subr.mxu0 0.0
    %187 = vmatpush2.msra.mxu0 0.0
    %188 = vmatprep.subr.mxu0 0.0
    %189 = vmatpush2.msra.mxu0 0.0
    %190 = vmatprep.subr.mxu0 0.0
    %191 = vmatpush2.msra.mxu0 0.0
    %192 = vmatprep.subr.mxu0 0.0
    %193 = vmatpush2.msra.mxu0 0.0
    %194 = vmatprep.subr.mxu0 0.0
    %195 = vmatpush2.msra.mxu0 0.0
    %196 = vmatprep.subr.mxu0 0.0
    %197 = vmatpush2.msra.mxu0 0.0
    %198 = vmatprep.subr.mxu0 0.0
    %199 = vmatpush2.msra.mxu0 0.0
    %200 = vmatprep.subr.mxu0 0.0
    %201 = vmatpush2.msra.mxu0 0.0
    %202 = vmatprep.subr.mxu0 0.0
    %203 = vmatpush2.msra.mxu0 0.0
    %204 = vmatprep.subr.mxu0 0.0
    %205 = vmatpush2.msra.mxu0 0.0
    %206 = vmatprep.subr.mxu0 0.0
    %207 = vmatpush2.msra.mxu0 0.0
    %208 = vmatprep.subr.mxu0 0.0
    %209 = vmatpush2.msra.mxu0 0.0
    %210 = vmatprep.subr.mxu0 0.0
    %211 = vmatpush2.msra.mxu0 0.0
    %212 = vmatprep.mubr.f32.mxu0 0.0
    %213 = vmatmul.mubr.f32.gmra.mxu0 %v126
    %v214 = vpop.f32.mrf.mxu0
    %v215 = vadd.f32 %v147, %v214
    %v216 = vpop.f32.mrf.mxu0
    %217 = vdwg.mxu0
    %218 = vst [vmem:[#allocation7] sm:$0xff] %v215
    // Predicated region
    $region18: #{tpu_custom_call.1} parent=1 // pred_check
      _
    $region19: #{tpu_custom_call.1} parent=1 // pred_check_branch
      %220 = sbr.rel (0) target = $region21
    $region20: #{tpu_custom_call.1} parent=1 // pred_region
      %s222 = ssub.s32 128, 128
      %223 = vsyncadd [#allocation4], %s222
      %s225 = sshll.u32 [#allocation7], 4
      %s226 = int_to_ptr.vmem [resolvable:$true] %s225
      %228 = dma.vmem_to_hbm [thread:$0]  %s226, 128, %s2, [#allocation4]
    $region21: #{tpu_custom_call.1} parent=1 // pred_fallthru
      _
    // Predicated region
    $region22: #{tpu_custom_call.1} parent=1 // pred_check
      _
    $region23: #{tpu_custom_call.1} parent=1 // pred_check_branch
      %230 = sbr.rel (0) target = $region25
    $region24: #{tpu_custom_call.1} parent=1 // pred_region
      %231 = dma.done [#allocation4], 128
    $region25: #{tpu_custom_call.1} parent=1 // pred_fallthru
      _
    %232 = vsyncpa [#allocation3], 1
    %233 = vsyncpa [#allocation6], 1
    %234 = vsyncpa [#allocation4], 1

</llo_original>
